<compile_context>
chip_gen: v5e
topology: v5e:2x2
jax: 0.10.0
libtpu: 0.0.40
codegen_flags: <defaults>
</compile_context>

<pallas_src>
import functools

import jax
import jax.numpy as jnp
from jax.experimental import pallas as pl
from jax.experimental.pallas import tpu as pltpu

_LANE = 128


def _round_up(x, m):
    return ((x + m - 1) // m) * m


def _sublane(dtype):
    # rows per sublane tile: 8 for f32, 16 for bf16, 32 for int8/fp8
    return 32 // jnp.dtype(dtype).itemsize


def _fit_tile(padded_dim, max_tile, align):
    """Largest multiple of `align` that is <= max_tile and divides padded_dim."""
    t = max(align, min(max_tile, padded_dim))
    t -= t % align
    while padded_dim % t:
        t -= align
    return t


# --------------------------------------------------------------------------- #
# Kernels
# --------------------------------------------------------------------------- #
def _linear_kernel_multi_k(x_ref, w_ref, b_ref, o_ref, acc_ref, *, n_k):
    # x_ref: (tm, tk)  w_ref: (tk, tn)  b_ref: (1, tn)  o_ref: (tm, tn)
    # acc_ref: (tm, tn) f32 scratch, resident across the K grid axis.
    k = pl.program_id(2)
    part = jnp.dot(x_ref[...], w_ref[...], preferred_element_type=jnp.float32)

    @pl.when(k == 0)
    def _first():
        acc_ref[...] = part          # direct write: no zero-init read-modify-write

    @pl.when(k != 0)
    def _accum():
        acc_ref[...] += part

    @pl.when(k == n_k - 1)
    def _finalize():
        o_ref[...] = (acc_ref[...] + b_ref[...].astype(jnp.float32)).astype(o_ref.dtype)


def _linear_kernel_single_k(x_ref, w_ref, b_ref, o_ref):
    # Single K step: bypass the scratch accumulator entirely.
    o_ref[...] = (
        jnp.dot(x_ref[...], w_ref[...], preferred_element_type=jnp.float32)
        + b_ref[...].astype(jnp.float32)
    ).astype(o_ref.dtype)


# --------------------------------------------------------------------------- #
# One-time (per layer) parameter layout prep — outside the hot path.
# --------------------------------------------------------------------------- #
def prepare_weight(weight, bias=None):
    """weight [O, H] -> w_t [Hp, Op] (transposed, lane-padded); bias [O] -> [1, Op].

    Doing the transpose + padding once here means the hot path never pays a
    per-tile XLU transpose nor a per-call weight jnp.pad.
    """
    O, H = weight.shape
    Hp = _round_up(H, _LANE)
    Op = _round_up(O, _LANE)
    w_t = jnp.transpose(weight)                      # [H, O]
    if (Hp, Op) != (H, O):
        w_t = jnp.pad(w_t, ((0, Hp - H), (0, Op - O)))
    if bias is None:
        b2d = jnp.zeros((1, Op), dtype=weight.dtype)
    else:
        b2d = bias.reshape(1, O)
        if Op != O:
            b2d = jnp.pad(b2d, ((0, 0), (0, Op - O)))
    return w_t, b2d


# --------------------------------------------------------------------------- #
# Forward pass
# --------------------------------------------------------------------------- #
@functools.partial(
    jax.jit,
    static_argnames=("out_features", "block_m", "block_n", "block_k", "vmem_budget_bytes"),
)
def column_parallel_linear(
    x,
    w_t,
    b2d,
    *,
    out_features,
    block_m=512,
    block_n=512,
    block_k=2048,
    vmem_budget_bytes=20 * 1024 * 1024,   # double-buffered tile budget (safe on v5e/v6e/v7x)
):
    """Y = X @ W.T + b.   x: [S, B, H];  w_t/b2d from prepare_weight();  returns (Y, None)."""
    S, B, H = x.shape
    Kp, Np = w_t.shape
    O = out_features
    M = S * B

    x_sz = jnp.dtype(x.dtype).itemsize
    w_sz = jnp.dtype(w_t.dtype).itemsize
    b_sz = jnp.dtype(b2d.dtype).itemsize
    o_sz = x_sz

    # ---- tile selection -----------------------------------------------------
    align_m = _sublane(x.dtype)                       # dtype-aware sublane rounding
    block_m = max(align_m, block_m - block_m % align_m)

    Mr = _round_up(M, align_m)
    tm = _fit_tile(Mr, block_m, align_m)              # prefer a divisor (no M padding)
    if tm < 256 and Mr > block_m:
        tm = block_m                                  # degenerate divisor -> pad instead
    tn = _fit_tile(Np, block_n, _LANE)
    tk = _fit_tile(Kp, block_k, _LANE)                # big K chunks: fewer grid steps

    def footprint(tm_, tn_, tk_):
        # double-buffered inputs + bias, double-buffered output, f32 accumulator
        return (2 * (tm_ * tk_ * x_sz + tk_ * tn_ * w_sz + tn_ * b_sz)
                + 2 * tm_ * tn_ * o_sz + tm_ * tn_ * 4)

    # Keep footprint inside the per-generation VMEM budget (v7x: 32 MiB scoped / 64 MiB phys).
    while footprint(tm, tn, tk) > vmem_budget_bytes and tk > _LANE:
        tk = _fit_tile(Kp, max(_LANE, tk // 2), _LANE)
    while footprint(tm, tn, tk) > vmem_budget_bytes and tn > _LANE:
        tn = _fit_tile(Np, max(_LANE, tn // 2), _LANE)
    while footprint(tm, tn, tk) > vmem_budget_bytes and tm > align_m:
        tm = max(align_m, (tm // 2) - (tm // 2) % align_m)

    Mp = _round_up(M, tm)

    # Megacore (v7x, 2 TCs): make sure the parallel axes expose >= 2 blocks when possible.
    if (Mp // tm) * (Np // tn) == 1 and tn >= 2 * _LANE:
        tn //= 2

    grid_m, grid_n, grid_k = Mp // tm, Np // tn, Kp // tk

    # ---- activations ---------------------------------------------------------
    x2d = x.reshape(M, H)
    if M != Mp or H != Kp:
        # Only for ragged shapes; zero K-padding is exact (padded W rows are zero).
        # TODO(synk): masked last-block store to avoid this copy for ragged M.
        x2d = jnp.pad(x2d, ((0, Mp - M), (0, Kp - H)))

    # ---- kernel / scratch selection ------------------------------------------
    if grid_k == 1:
        kernel = _linear_kernel_single_k
        scratch = []
    else:
        kernel = functools.partial(_linear_kernel_multi_k, n_k=grid_k)
        scratch = [pltpu.VMEM((tm, tn), jnp.float32)]

    cost = pl.CostEstimate(
        flops=2 * M * O * H,
        transcendentals=0,
        bytes_accessed=int(grid_n * Mp * Kp * x_sz       # X re-read per N block
                           + grid_m * Kp * Np * w_sz     # W re-read per M block
                           + Np * b_sz
                           + Mp * Np * o_sz),
    )

    vmem_limit = int(min(max(footprint(tm, tn, tk) * 3 // 2 + (2 << 20), 16 << 20), 48 << 20))

    out2d = pl.pallas_call(
        kernel,
        out_shape=jax.ShapeDtypeStruct((Mp, Np), x.dtype),
        grid_spec=pltpu.PrefetchScalarGridSpec(
            num_scalar_prefetch=0,
            grid=(grid_m, grid_n, grid_k),
            in_specs=[
                pl.BlockSpec((tm, tk), lambda i, j, k: (i, k)),   # X tile
                pl.BlockSpec((tk, tn), lambda i, j, k: (k, j)),   # W tile ([H, O] layout)
                pl.BlockSpec((1, tn), lambda i, j, k: (0, j)),    # bias tile
            ],
            out_specs=pl.BlockSpec((tm, tn), lambda i, j, k: (i, j)),
            scratch_shapes=scratch,
        ),
        compiler_params=pltpu.CompilerParams(
            dimension_semantics=("parallel", "parallel", "arbitrary"),
            vmem_limit_bytes=vmem_limit,
        ),
        cost_estimate=cost,
    )(x2d, w_t, b2d)

    out2d = out2d[:M, :O]
    output = out2d.reshape(S, B, O)
    # gather_output=True with world_size=1 -> all-gather is the identity.
    # skip_bias_add=False -> bias already fused, returned bias is None.
    # TODO(synk): multi-device tensor-parallel all-gather (world_size > 1) not modeled here.
    return output, None


def init_params(key, input_size, output_size, dtype=jnp.float32):
    """Parameter init matching the module's __init__ (world_size=1).

    weight: [output_size, input_size], xavier_normal_ (std = sqrt(2/(fan_in+fan_out)))
    bias:   [output_size], zeros
    """
    std = (2.0 / (input_size + output_size)) ** 0.5
    weight = std * jax.random.normal(key, (output_size, input_size), dtype=jnp.float32)
    weight = weight.astype(dtype)
    bias = jnp.zeros((output_size,), dtype=dtype)
    return weight, bias


if __name__ == "__main__":
    # Small shapes: seq=8, batch=2, hidden=32, output=64
    seq, batch, hidden, output_size = 8, 2, 32, 64

    key = jax.random.PRNGKey(0)
    k_x, k_w = jax.random.split(key)

    x = jax.random.normal(k_x, (seq, batch, hidden), dtype=jnp.float32)
    weight, bias = init_params(k_w, hidden, output_size, dtype=jnp.float32)

    # One-time layout prep per layer (outside the hot path).
    w_t, b2d = prepare_weight(weight, bias)

    out, out_bias = column_parallel_linear(x, w_t, b2d, out_features=output_size)
    out = jax.block_until_ready(out)

    # Reference check against plain JAX (F.linear semantics).
    ref = jnp.einsum("sbh,oh->sbo", x, weight) + bias
    assert out.shape == (seq, batch, output_size)
    assert out_bias is None
    assert jnp.allclose(out, ref, atol=1e-5, rtol=1e-5)

    print("KERNEL_OK")
</pallas_src>

<mosaic_0001>
module attributes {stable_mosaic.version = 11 : i64} {
  func.func @_linear_kernel_single_k(%arg0: i32, %arg1: i32, %arg2: i32, %arg3: memref<16x128xf32, #tpu.memory_space<vmem>>, %arg4: memref<128x128xf32, #tpu.memory_space<vmem>>, %arg5: memref<1x128xf32, #tpu.memory_space<vmem>>, %arg6: memref<16x128xf32, #tpu.memory_space<vmem>>) attributes {dimension_semantics = [#tpu.dimension_semantics<parallel>, #tpu.dimension_semantics<parallel>, #tpu.dimension_semantics<arbitrary>], iteration_bounds = array<i64: 1, 1, 1>, scalar_prefetch = 0 : i64, scratch_operands = 0 : i64, tpu.core_type = #tpu.core_type<tc>, window_params = [{transform_indices = @transform_0, window_bounds = array<i64: 16, 128>}, {transform_indices = @transform_1, window_bounds = array<i64: 128, 128>}, {transform_indices = @transform_2, window_bounds = array<i64: 1, 128>}, {transform_indices = @transform_3, window_bounds = array<i64: 16, 128>}]} {
    %c0 = arith.constant 0 : index
    %c0_0 = arith.constant 0 : index
    %0 = vector.load %arg3[%c0, %c0_0] : memref<16x128xf32, #tpu.memory_space<vmem>>, vector<16x128xf32>
    %c0_1 = arith.constant 0 : index
    %c0_2 = arith.constant 0 : index
    %1 = vector.load %arg4[%c0_1, %c0_2] : memref<128x128xf32, #tpu.memory_space<vmem>>, vector<128x128xf32>
    %cst = arith.constant dense<0.000000e+00> : vector<16x128xf32>
    %2 = tpu.matmul %0, %1, %cst {dimension_numbers = #tpu.dot_dimension_numbers<[1], [0], [0], [1], [0, 0, 1, 1], [], []>} : vector<16x128xf32>, vector<128x128xf32>, vector<16x128xf32> -> vector<16x128xf32>
    %c0_3 = arith.constant 0 : index
    %c0_4 = arith.constant 0 : index
    %3 = vector.load %arg5[%c0_3, %c0_4] : memref<1x128xf32, #tpu.memory_space<vmem>>, vector<1x128xf32>
    %4 = vector.broadcast %3 : vector<1x128xf32> to vector<16x128xf32>
    %5 = arith.addf %2, %4 : vector<16x128xf32>
    %c0_5 = arith.constant 0 : index
    %c0_6 = arith.constant 0 : index
    %6 = vector.load %arg6[%c0_5, %c0_6] : memref<16x128xf32, #tpu.memory_space<vmem>>, vector<16x128xf32>
    tpu.vector_store %arg6[%c0_5, %c0_6], %5 {strides = array<i32>} : memref<16x128xf32, #tpu.memory_space<vmem>>, vector<16x128xf32>,
    return
  }
  func.func @transform_0(%arg0: i32, %arg1: i32, %arg2: i32) -> (i32, i32) {
    %c0_i32 = arith.constant 0 : i32
    return %arg0, %arg2 : i32, i32
  }
  func.func @transform_1(%arg0: i32, %arg1: i32, %arg2: i32) -> (i32, i32) {
    %c0_i32 = arith.constant 0 : i32
    return %arg2, %arg1 : i32, i32
  }
  func.func @transform_2(%arg0: i32, %arg1: i32, %arg2: i32) -> (i32, i32) {
    %c0_i32 = arith.constant 0 : i32
    %c0_i32_0 = arith.constant 0 : i32
    return %c0_i32, %arg1 : i32, i32
  }
  func.func @transform_3(%arg0: i32, %arg1: i32, %arg2: i32) -> (i32, i32) {
    %c0_i32 = arith.constant 0 : i32
    return %arg0, %arg1 : i32, i32
  }
}

</mosaic_0001>

<llo_original>
// kernel: column_parallel_linear.1
$region0: #{column_parallel_linear.1}
  #allocation0 [shape = 'u32[]', space=smem, size = 0x4, offset = 0x4, fixed_abs, tag = 'smem constant byte address 0x4 - core index']
  #allocation1 [shape = 'u32[72,128]{1,0:T(1,128)}', space=vmem, size = 0x9000, scoped, tag = 'internal scratch']
  %s0 = inlined_call_operand.vmem [shape: f32[16,128], index: 0, kind: input, shape index: {}]
  %s1 = inlined_call_operand.hbm [shape: f32[128,128], index: 1, kind: input, shape index: {}]
  %s2 = inlined_call_operand.vmem [shape: f32[1,128], index: 2, kind: input, shape index: {}]
  %s3 = inlined_call_operand.hbm [shape: f32[16,128], index: 3, kind: output, shape index: {}]
  %s4 = sld [smem:[#allocation0]]
  $region26: #{column_parallel_linear.1} parent=0
    _
  %s6 = ssub.s32 1, %s4
  %s7 = scalar_select 0, %s6, %s4
  $region1: #{column_parallel_linear.1} parent=0
    #allocation2 [shape = 'u8[65536]{0}', space=vmem, size = 0x10000, scoped, tag = 'input window, operand 1, single buffered']
    #allocation3 [shape = 's32[1]{0}', space=sflag, size = 0x4, scoped, tag = 'scoped memory for column_parallel_linear.1']
    #allocation4 [shape = 's32[1]{0}', space=sflag, size = 0x4, scoped, tag = 'scoped memory for column_parallel_linear.1']
    #allocation5 [shape = 'u8[8192]{0}', space=vmem, size = 0x2000, scoped, tag = 'output window, operand 0, single buffered']
    %8 = vsyncpa [#allocation3], 0
    %9 = vsyncpa [#allocation4], 0
    // Predicated region
    $region2: #{column_parallel_linear.1} parent=1 // pred_check
      _
    $region3: #{column_parallel_linear.1} parent=1 // pred_check_branch
      %11 = sbr.rel (0) target = $region5
    $region4: #{column_parallel_linear.1} parent=1 // pred_region
      _
    $region5: #{column_parallel_linear.1} parent=1 // pred_fallthru
      _
    // Predicated region
    $region6: #{column_parallel_linear.1} parent=1 // pred_check
      _
    $region7: #{column_parallel_linear.1} parent=1 // pred_check_branch
      %13 = sbr.rel (0) target = $region9
    $region8: #{column_parallel_linear.1} parent=1 // pred_region
      %15 = vsyncadd [#allocation3], 0
      %s16 = sshll.u32 %s1, 4
      %s17 = int_to_ptr.hbm [resolvable:$true] %s16
      %s18 = sshll.u32 [#allocation2], 4
      %s19 = int_to_ptr.vmem [resolvable:$true] %s18
      %24 = dma.hbm_to_vmem [thread:$0]  %s17, 2048, %s19, [#allocation3], 128, 128, 8
    $region9: #{column_parallel_linear.1} parent=1 // pred_fallthru
      _
    // Predicated region
    $region10: #{column_parallel_linear.1} parent=1 // pred_check
      _
    $region11: #{column_parallel_linear.1} parent=1 // pred_check_branch
      %26 = sbr.rel (0) target = $region13
    $region12: #{column_parallel_linear.1} parent=1 // pred_region
      _
    $region13: #{column_parallel_linear.1} parent=1 // pred_fallthru
      _
    // Predicated region
    $region14: #{column_parallel_linear.1} parent=1 // pred_check
      _
    $region15: #{column_parallel_linear.1} parent=1 // pred_check_branch
      %28 = sbr.rel (0) target = $region17
    $region16: #{column_parallel_linear.1} parent=1 // pred_region
      %30 = dma.done [#allocation3], 2048
    $region17: #{column_parallel_linear.1} parent=1 // pred_fallthru
      _
    %v31 = vld [vmem:[%s0] sm:$0xff]
    %v32 = vld [vmem:[%s0 + $0x8] sm:$0xff]
    %v33 = vld [vmem:[#allocation2] sm:$0xff]
    %v34 = vld [vmem:[#allocation2 + $0x8] sm:$0xff]
    %v35 = vld [vmem:[#allocation2 + $0x10] sm:$0xff]
    %v36 = vld [vmem:[#allocation2 + $0x18] sm:$0xff]
    %v37 = vld [vmem:[#allocation2 + $0x20] sm:$0xff]
    %v38 = vld [vmem:[#allocation2 + $0x28] sm:$0xff]
    %v39 = vld [vmem:[#allocation2 + $0x30] sm:$0xff]
    %v40 = vld [vmem:[#allocation2 + $0x38] sm:$0xff]
    %v41 = vld [vmem:[#allocation2 + $0x40] sm:$0xff]
    %v42 = vld [vmem:[#allocation2 + $0x48] sm:$0xff]
    %v43 = vld [vmem:[#allocation2 + $0x50] sm:$0xff]
    %v44 = vld [vmem:[#allocation2 + $0x58] sm:$0xff]
    %v45 = vld [vmem:[#allocation2 + $0x60] sm:$0xff]
    %v46 = vld [vmem:[#allocation2 + $0x68] sm:$0xff]
    %v47 = vld [vmem:[#allocation2 + $0x70] sm:$0xff]
    %v48 = vld [vmem:[#allocation2 + $0x78] sm:$0xff]
    %v49 = vld [vmem:[%s2] sm:$0x1]
    %v51 = vperm.slane %v49, 0
    %53 = vmatpush.msra.mxu0 %v48
    %54 = vmatpush.msra.mxu0 %v47
    %55 = vmatpush.msra.mxu0 %v46
    %56 = vmatpush.msra.mxu0 %v45
    %57 = vmatpush.msra.mxu0 %v44
    %58 = vmatpush.msra.mxu0 %v43
    %59 = vmatpush.msra.mxu0 %v42
    %60 = vmatpush.msra.mxu0 %v41
    %61 = vmatpush.msra.mxu0 %v40
    %62 = vmatpush.msra.mxu0 %v39
    %63 = vmatpush.msra.mxu0 %v38
    %64 = vmatpush.msra.mxu0 %v37
    %65 = vmatpush.msra.mxu0 %v36
    %66 = vmatpush.msra.mxu0 %v35
    %67 = vmatpush.msra.mxu0 %v34
    %68 = vmatpush.msra.mxu0 %v33
    %69 = vmatmul.f32.gmra.mxu0 %v31
    %v70 = vpop.f32.mrf.mxu0
    %v71 = vadd.f32 %v51, %v70
    %72 = vmatmul.f32.gmra.mxu0 %v32
    %v73 = vpop.f32.mrf.mxu0
    %v74 = vadd.f32 %v51, %v73
    %75 = vdwg.mxu0
    %76 = vst [vmem:[#allocation5] sm:$0xff] %v71
    %77 = vst [vmem:[#allocation5 + $0x8] sm:$0xff] %v74
    // Predicated region
    $region18: #{column_parallel_linear.1} parent=1 // pred_check
      _
    $region19: #{column_parallel_linear.1} parent=1 // pred_check_branch
      %79 = sbr.rel (0) target = $region21
    $region20: #{column_parallel_linear.1} parent=1 // pred_region
      %81 = vsyncadd [#allocation4], 0
      %s82 = sshll.u32 [#allocation5], 4
      %s83 = int_to_ptr.vmem [resolvable:$true] %s82
      %s84 = sshll.u32 %s3, 4
      %s85 = int_to_ptr.hbm [resolvable:$true] %s84
      %90 = dma.vmem_to_hbm [thread:$0]  %s83, 256, %s85, [#allocation4], 128, 128, 8
    $region21: #{column_parallel_linear.1} parent=1 // pred_fallthru
      _
    // Predicated region
    $region22: #{column_parallel_linear.1} parent=1 // pred_check
      _
    $region23: #{column_parallel_linear.1} parent=1 // pred_check_branch
      %92 = sbr.rel (0) target = $region25
    $region24: #{column_parallel_linear.1} parent=1 // pred_region
      %94 = dma.done [#allocation4], 256
    $region25: #{column_parallel_linear.1} parent=1 // pred_fallthru
      _
    %95 = vsyncpa [#allocation3], 1
    %96 = vsyncpa [#allocation4], 1

</llo_original>
